<compile_context>
chip_gen: v7x
topology: tpu7x:2x2x1
jax: 0.10.0
libtpu: 0.0.40
codegen_flags: <defaults>
</compile_context>

<pallas_src>
import jax
import jax.numpy as jnp
from jax.experimental import pallas as pl
from jax.experimental.pallas import tpu as pltpu

# Logical (PyTorch) dims
D_IN, D_H, D_OUT = 784, 200, 10
# Lane-padded dims (multiples of 128; 256 matches the 2x256^2 MXU on v6e/v7x)
D_IN_P, D_H_P, D_OUT_P = 896, 256, 128
NEG_SLOPE = 0.01  # PyTorch nn.LeakyReLU default


def _leaky_relu(x):
    return jnp.where(x > 0, x, NEG_SLOPE * x)


def mlp_kernel(x_ref, w1_ref, b1_ref, w2_ref, b2_ref, w3_ref, b3_ref, o_ref):
    # Three bf16 MXU matmuls with fp32 accumulation, fused with fp32 bias add +
    # LeakyReLU (VPU), re-cast to bf16 only for the next MXU pass.
    x = x_ref[...]  # bf16 [TB, D_IN_P]

    h = jnp.dot(x, w1_ref[...], preferred_element_type=jnp.float32) + b1_ref[...]
    h = _leaky_relu(h).astype(jnp.bfloat16)

    h = jnp.dot(h, w2_ref[...], preferred_element_type=jnp.float32) + b2_ref[...]
    h = _leaky_relu(h).astype(jnp.bfloat16)

    h = jnp.dot(h, w3_ref[...], preferred_element_type=jnp.float32) + b3_ref[...]
    h = _leaky_relu(h)

    o_ref[...] = h.astype(o_ref.dtype)


def mlp_forward(x, padded_params, *, tb=512):
    """x: [B, 784] float. padded_params: from pad_and_cast_params. Returns fp32 [B, 10]."""
    w1, b1, w2, b2, w3, b3 = padded_params
    B = x.shape[0]

    # Batch tile: multiple of 8 sublanes, capped at the (8-padded) batch so small
    # batches don't pad up to a full 512-row tile.
    b8 = ((B + 7) // 8) * 8
    tb = min(tb, b8)
    b_pad = ((B + tb - 1) // tb) * tb
    grid = (b_pad // tb,)

    # Zero-pad batch + input features; cast activations to bf16 once on the way in.
    xp = jnp.zeros((b_pad, D_IN_P), jnp.bfloat16).at[:B, :D_IN].set(
        x.astype(jnp.bfloat16))

    # Weights/biases map to the same block every grid step -> DMA'd once, stay
    # resident in VMEM; only the x / out tiles are pipelined.
    resident = lambda shape: pl.BlockSpec(shape, lambda i: (0, 0))

    out = pl.pallas_call(
        mlp_kernel,
        out_shape=jax.ShapeDtypeStruct((b_pad, D_OUT_P), jnp.float32),
        grid=grid,
        in_specs=[
            pl.BlockSpec((tb, D_IN_P), lambda i: (i, 0)),   # x: tiled over batch
            resident((D_IN_P, D_H_P)),
            resident((1, D_H_P)),
            resident((D_H_P, D_H_P)),
            resident((1, D_H_P)),
            resident((D_H_P, D_OUT_P)),
            resident((1, D_OUT_P)),
        ],
        out_specs=pl.BlockSpec((tb, D_OUT_P), lambda i: (i, 0)),
        compiler_params=pltpu.CompilerParams(
            # batch tiles are independent -> megacore sharding on v7x
            dimension_semantics=("parallel",),
        ),
    )(xp, w1, b1, w2, b2, w3, b3)

    return out[:B, :D_OUT]


def init_params(key):
    # PyTorch nn.Linear default init: U(-1/sqrt(fan_in), 1/sqrt(fan_in)).
    # Stored as [in, out] so the kernel computes y = x @ W + b (== x @ W_pt.T + b).
    ks = jax.random.split(key, 6)

    def linear(kw, kb, fan_in, fan_out):
        bound = 1.0 / jnp.sqrt(fan_in)
        w = jax.random.uniform(kw, (fan_in, fan_out), jnp.float32, -bound, bound)
        b = jax.random.uniform(kb, (1, fan_out), jnp.float32, -bound, bound)
        return w, b

    w1, b1 = linear(ks[0], ks[1], D_IN, D_H)
    w2, b2 = linear(ks[2], ks[3], D_H, D_H)
    w3, b3 = linear(ks[4], ks[5], D_H, D_OUT)
    return (w1, b1, w2, b2, w3, b3)


def pad_and_cast_params(params):
    """One-time weight preprocessing: zero-pad to lane-aligned shapes, cast weights
    to bf16 (biases stay fp32 so the bias add happens in fp32 on the dot output).
    Zero padding is exact: padded W rows multiply zero-padded inputs, padded bias
    columns are 0 and LeakyReLU(0) = 0, and padded output columns are sliced away."""
    w1, b1, w2, b2, w3, b3 = params

    def pad2(a, r, c):
        return jnp.pad(a, ((0, r - a.shape[0]), (0, c - a.shape[1])))

    w1p = pad2(w1, D_IN_P, D_H_P).astype(jnp.bfloat16)
    b1p = pad2(b1, 1, D_H_P)                       # fp32
    w2p = pad2(w2, D_H_P, D_H_P).astype(jnp.bfloat16)
    b2p = pad2(b2, 1, D_H_P)                       # fp32
    w3p = pad2(w3, D_H_P, D_OUT_P).astype(jnp.bfloat16)
    b3p = pad2(b3, 1, D_OUT_P)                     # fp32
    return (w1p, b1p, w2p, b2p, w3p, b3p)


def mlp_reference(x, params):
    w1, b1, w2, b2, w3, b3 = params
    h = _leaky_relu(x @ w1 + b1)
    h = _leaky_relu(h @ w2 + b2)
    h = _leaky_relu(h @ w3 + b3)
    return h


if __name__ == "__main__":
    key = jax.random.PRNGKey(0)
    k_x, k_p = jax.random.split(key)

    B = 8  # small example batch; kernel is intended for large batched calls
    x = jax.random.normal(k_x, (B, D_IN), dtype=jnp.float32)
    params = init_params(k_p)
    padded_params = pad_and_cast_params(params)

    out = mlp_forward(x, padded_params)
    out = jax.block_until_ready(out)

    ref = mlp_reference(x, params)  # fp32 reference
    assert out.shape == (B, D_OUT)
    # bf16 inputs/weights -> loosened tolerance vs fp32 reference
    assert jnp.allclose(out, ref, atol=5e-2, rtol=5e-2)

    print("KERNEL_OK")
</pallas_src>

<mosaic_0001>
module attributes {stable_mosaic.version = 11 : i64} {
  func.func @mlp_kernel(%arg0: i32, %arg1: memref<8x896xbf16, #tpu.memory_space<vmem>>, %arg2: memref<896x256xbf16, #tpu.memory_space<vmem>>, %arg3: memref<1x256xf32, #tpu.memory_space<vmem>>, %arg4: memref<256x256xbf16, #tpu.memory_space<vmem>>, %arg5: memref<1x256xf32, #tpu.memory_space<vmem>>, %arg6: memref<256x128xbf16, #tpu.memory_space<vmem>>, %arg7: memref<1x128xf32, #tpu.memory_space<vmem>>, %arg8: memref<8x128xf32, #tpu.memory_space<vmem>>) attributes {dimension_semantics = [#tpu.dimension_semantics<parallel>], iteration_bounds = array<i64: 1>, scalar_prefetch = 0 : i64, scratch_operands = 0 : i64, tpu.core_type = #tpu.core_type<tc>, window_params = [{transform_indices = @transform_0, window_bounds = array<i64: 8, 896>}, {pipeline_mode = #tpu.pipeline_mode<synchronous>, transform_indices = @transform_1, window_bounds = array<i64: 896, 256>}, {pipeline_mode = #tpu.pipeline_mode<synchronous>, transform_indices = @transform_2, window_bounds = array<i64: 1, 256>}, {pipeline_mode = #tpu.pipeline_mode<synchronous>, transform_indices = @transform_3, window_bounds = array<i64: 256, 256>}, {pipeline_mode = #tpu.pipeline_mode<synchronous>, transform_indices = @transform_4, window_bounds = array<i64: 1, 256>}, {pipeline_mode = #tpu.pipeline_mode<synchronous>, transform_indices = @transform_5, window_bounds = array<i64: 256, 128>}, {pipeline_mode = #tpu.pipeline_mode<synchronous>, transform_indices = @transform_6, window_bounds = array<i64: 1, 128>}, {transform_indices = @transform_7, window_bounds = array<i64: 8, 128>}]} {
    %c0 = arith.constant 0 : index
    %c0_0 = arith.constant 0 : index
    %0 = vector.load %arg1[%c0, %c0_0] : memref<8x896xbf16, #tpu.memory_space<vmem>>, vector<8x896xbf16>
    %c0_1 = arith.constant 0 : index
    %c0_2 = arith.constant 0 : index
    %1 = vector.load %arg2[%c0_1, %c0_2] : memref<896x256xbf16, #tpu.memory_space<vmem>>, vector<896x256xbf16>
    %cst = arith.constant dense<0.000000e+00> : vector<8x256xf32>
    %2 = tpu.matmul %0, %1, %cst {dimension_numbers = #tpu.dot_dimension_numbers<[1], [0], [0], [1], [0, 0, 1, 1], [], []>} : vector<8x896xbf16>, vector<896x256xbf16>, vector<8x256xf32> -> vector<8x256xf32>
    %c0_3 = arith.constant 0 : index
    %c0_4 = arith.constant 0 : index
    %3 = vector.load %arg3[%c0_3, %c0_4] : memref<1x256xf32, #tpu.memory_space<vmem>>, vector<1x256xf32>
    %4 = vector.broadcast %3 : vector<1x256xf32> to vector<8x256xf32>
    %5 = arith.addf %2, %4 : vector<8x256xf32>
    %cst_5 = arith.constant 0.000000e+00 : f32
    %6 = vector.broadcast %cst_5 : f32 to vector<8x256xf32>
    %7 = arith.cmpf ogt, %5, %6 : vector<8x256xf32>
    %cst_6 = arith.constant 0.00999999977 : f32
    %8 = vector.broadcast %cst_6 : f32 to vector<8x256xf32>
    %9 = arith.mulf %8, %5 : vector<8x256xf32>
    %10 = arith.select %7, %5, %9 : vector<8x256xi1>, vector<8x256xf32>
    %11 = arith.truncf %10 : vector<8x256xf32> to vector<8x256xbf16>
    %c0_7 = arith.constant 0 : index
    %c0_8 = arith.constant 0 : index
    %12 = vector.load %arg4[%c0_7, %c0_8] : memref<256x256xbf16, #tpu.memory_space<vmem>>, vector<256x256xbf16>
    %cst_9 = arith.constant dense<0.000000e+00> : vector<8x256xf32>
    %13 = tpu.matmul %11, %12, %cst_9 {dimension_numbers = #tpu.dot_dimension_numbers<[1], [0], [0], [1], [0, 0, 1, 1], [], []>} : vector<8x256xbf16>, vector<256x256xbf16>, vector<8x256xf32> -> vector<8x256xf32>
    %c0_10 = arith.constant 0 : index
    %c0_11 = arith.constant 0 : index
    %14 = vector.load %arg5[%c0_10, %c0_11] : memref<1x256xf32, #tpu.memory_space<vmem>>, vector<1x256xf32>
    %15 = vector.broadcast %14 : vector<1x256xf32> to vector<8x256xf32>
    %16 = arith.addf %13, %15 : vector<8x256xf32>
    %cst_12 = arith.constant 0.000000e+00 : f32
    %17 = vector.broadcast %cst_12 : f32 to vector<8x256xf32>
    %18 = arith.cmpf ogt, %16, %17 : vector<8x256xf32>
    %cst_13 = arith.constant 0.00999999977 : f32
    %19 = vector.broadcast %cst_13 : f32 to vector<8x256xf32>
    %20 = arith.mulf %19, %16 : vector<8x256xf32>
    %21 = arith.select %18, %16, %20 : vector<8x256xi1>, vector<8x256xf32>
    %22 = arith.truncf %21 : vector<8x256xf32> to vector<8x256xbf16>
    %c0_14 = arith.constant 0 : index
    %c0_15 = arith.constant 0 : index
    %23 = vector.load %arg6[%c0_14, %c0_15] : memref<256x128xbf16, #tpu.memory_space<vmem>>, vector<256x128xbf16>
    %cst_16 = arith.constant dense<0.000000e+00> : vector<8x128xf32>
    %24 = tpu.matmul %22, %23, %cst_16 {dimension_numbers = #tpu.dot_dimension_numbers<[1], [0], [0], [1], [0, 0, 1, 1], [], []>} : vector<8x256xbf16>, vector<256x128xbf16>, vector<8x128xf32> -> vector<8x128xf32>
    %c0_17 = arith.constant 0 : index
    %c0_18 = arith.constant 0 : index
    %25 = vector.load %arg7[%c0_17, %c0_18] : memref<1x128xf32, #tpu.memory_space<vmem>>, vector<1x128xf32>
    %26 = vector.broadcast %25 : vector<1x128xf32> to vector<8x128xf32>
    %27 = arith.addf %24, %26 : vector<8x128xf32>
    %cst_19 = arith.constant 0.000000e+00 : f32
    %28 = vector.broadcast %cst_19 : f32 to vector<8x128xf32>
    %29 = arith.cmpf ogt, %27, %28 : vector<8x128xf32>
    %cst_20 = arith.constant 0.00999999977 : f32
    %30 = vector.broadcast %cst_20 : f32 to vector<8x128xf32>
    %31 = arith.mulf %30, %27 : vector<8x128xf32>
    %32 = arith.select %29, %27, %31 : vector<8x128xi1>, vector<8x128xf32>
    %c0_21 = arith.constant 0 : index
    %c0_22 = arith.constant 0 : index
    %33 = vector.load %arg8[%c0_21, %c0_22] : memref<8x128xf32, #tpu.memory_space<vmem>>, vector<8x128xf32>
    tpu.vector_store %arg8[%c0_21, %c0_22], %32 {strides = array<i32>} : memref<8x128xf32, #tpu.memory_space<vmem>>, vector<8x128xf32>,
    return
  }
  func.func @transform_0(%arg0: i32) -> (i32, i32) {
    %c0_i32 = arith.constant 0 : i32
    %c0_i32_0 = arith.constant 0 : i32
    return %arg0, %c0_i32 : i32, i32
  }
  func.func @transform_1(%arg0: i32) -> (i32, i32) {
    %c0_i32 = arith.constant 0 : i32
    %c0_i32_0 = arith.constant 0 : i32
    %c0_i32_1 = arith.constant 0 : i32
    return %c0_i32, %c0_i32_0 : i32, i32
  }
  func.func @transform_2(%arg0: i32) -> (i32, i32) {
    %c0_i32 = arith.constant 0 : i32
    %c0_i32_0 = arith.constant 0 : i32
    %c0_i32_1 = arith.constant 0 : i32
    return %c0_i32, %c0_i32_0 : i32, i32
  }
  func.func @transform_3(%arg0: i32) -> (i32, i32) {
    %c0_i32 = arith.constant 0 : i32
    %c0_i32_0 = arith.constant 0 : i32
    %c0_i32_1 = arith.constant 0 : i32
    return %c0_i32, %c0_i32_0 : i32, i32
  }
  func.func @transform_4(%arg0: i32) -> (i32, i32) {
    %c0_i32 = arith.constant 0 : i32
    %c0_i32_0 = arith.constant 0 : i32
    %c0_i32_1 = arith.constant 0 : i32
    return %c0_i32, %c0_i32_0 : i32, i32
  }
  func.func @transform_5(%arg0: i32) -> (i32, i32) {
    %c0_i32 = arith.constant 0 : i32
    %c0_i32_0 = arith.constant 0 : i32
    %c0_i32_1 = arith.constant 0 : i32
    return %c0_i32, %c0_i32_0 : i32, i32
  }
  func.func @transform_6(%arg0: i32) -> (i32, i32) {
    %c0_i32 = arith.constant 0 : i32
    %c0_i32_0 = arith.constant 0 : i32
    %c0_i32_1 = arith.constant 0 : i32
    return %c0_i32, %c0_i32_0 : i32, i32
  }
  func.func @transform_7(%arg0: i32) -> (i32, i32) {
    %c0_i32 = arith.constant 0 : i32
    %c0_i32_0 = arith.constant 0 : i32
    return %arg0, %c0_i32 : i32, i32
  }
}

</mosaic_0001>

<llo_original>
// kernel: tpu_custom_call.1
$region0: #{tpu_custom_call.1}
  #allocation0 [shape = 'u32[]', space=smem, size = 0x4, offset = 0x4, fixed_abs, tag = 'smem constant byte address 0x4 - core index']
  #allocation1 [shape = 'u32[144,128]{1,0:T(1,128)}', space=vmem, size = 0x12000, scoped, tag = 'internal scratch']
  %s0 = inlined_call_operand.hbm [shape: bf16[8,896], index: 0, kind: input, shape index: {}]
  %s1 = inlined_call_operand.hbm [shape: bf16[896,256], index: 1, kind: input, shape index: {}]
  %s2 = inlined_call_operand.vmem [shape: f32[1,256], index: 2, kind: input, shape index: {}]
  %s3 = inlined_call_operand.hbm [shape: bf16[256,256], index: 3, kind: input, shape index: {}]
  %s4 = inlined_call_operand.vmem [shape: f32[1,256], index: 4, kind: input, shape index: {}]
  %s5 = inlined_call_operand.hbm [shape: bf16[256,128], index: 5, kind: input, shape index: {}]
  %s6 = inlined_call_operand.vmem [shape: f32[1,128], index: 6, kind: input, shape index: {}]
  %s7 = inlined_call_operand.hbm [shape: f32[8,128], index: 7, kind: output, shape index: {}]
  %s8 = sld [smem:[#allocation0]]
  $region54: #{tpu_custom_call.1} parent=0
    _
  %s10 = ssub.s32 1, %s8
  %s11 = scalar_select 0, %s10, %s8
  $region1: #{tpu_custom_call.1} parent=0
    #allocation2 [shape = 'u8[14336]{0}', space=vmem, size = 0x3800, scoped, tag = 'input window, operand 0, single buffered']
    #allocation3 [shape = 's32[1]{0}', space=sflag, size = 0x4, scoped, tag = 'scoped memory for tpu_custom_call.1']
    #allocation4 [shape = 's32[1]{0}', space=sflag, size = 0x4, scoped, tag = 'scoped memory for tpu_custom_call.1']
    #allocation5 [shape = 'u8[458752]{0}', space=vmem, size = 0x70000, scoped, tag = 'input window, operand 1, single buffered']
    #allocation6 [shape = 's32[1]{0}', space=sflag, size = 0x4, scoped, tag = 'scoped memory for tpu_custom_call.1']
    #allocation7 [shape = 'u8[131072]{0}', space=vmem, size = 0x20000, scoped, tag = 'input window, operand 3, single buffered']
    #allocation8 [shape = 'u8[65536]{0}', space=vmem, size = 0x10000, scoped, tag = 'input window, operand 5, single buffered']
    #allocation9 [shape = 's32[1]{0}', space=sflag, size = 0x4, scoped, tag = 'scoped memory for tpu_custom_call.1']
    #allocation10 [shape = 'u8[4096]{0}', space=vmem, size = 0x1000, scoped, tag = 'output window, operand 0, single buffered']
    %12 = vsyncpa [#allocation3], 0
    %13 = vsyncpa [#allocation6], 0
    %14 = vsyncpa [#allocation9], 0
    %15 = vsyncpa [#allocation4], 0
    // Predicated region
    $region2: #{tpu_custom_call.1} parent=1 // pred_check
      _
    $region3: #{tpu_custom_call.1} parent=1 // pred_check_branch
      %17 = sbr.rel (0) target = $region5
    $region4: #{tpu_custom_call.1} parent=1 // pred_region
      %s19 = ssub.s32 448, 448
      %20 = vsyncadd [#allocation3], %s19
      %s22 = sshll.u32 [#allocation2], 4
      %s23 = int_to_ptr.vmem [resolvable:$true] %s22
      %25 = dma.hbm_to_vmem [thread:$0]  %s0, 448, %s23, [#allocation3]
    $region5: #{tpu_custom_call.1} parent=1 // pred_fallthru
      _
    // Predicated region
    $region6: #{tpu_custom_call.1} parent=1 // pred_check
      _
    $region7: #{tpu_custom_call.1} parent=1 // pred_check_branch
      %27 = sbr.rel (0) target = $region9
    $region8: #{tpu_custom_call.1} parent=1 // pred_region
      %s29 = ssub.s32 14336, 14336
      %30 = vsyncadd [#allocation6], %s29
      %s31 = sshll.u32 [#allocation5], 4
      %s32 = int_to_ptr.vmem [resolvable:$true] %s31
      %37 = dma.hbm_to_vmem [thread:$0]  %s1, 14336, %s32, [#allocation6], 128, 128, 8
    $region9: #{tpu_custom_call.1} parent=1 // pred_fallthru
      _
    // Predicated region
    $region10: #{tpu_custom_call.1} parent=1 // pred_check
      _
    $region11: #{tpu_custom_call.1} parent=1 // pred_check_branch
      %39 = sbr.rel (0) target = $region13
    $region12: #{tpu_custom_call.1} parent=1 // pred_region
      _
    $region13: #{tpu_custom_call.1} parent=1 // pred_fallthru
      _
    // Predicated region
    $region14: #{tpu_custom_call.1} parent=1 // pred_check
      _
    $region15: #{tpu_custom_call.1} parent=1 // pred_check_branch
      %41 = sbr.rel (0) target = $region17
    $region16: #{tpu_custom_call.1} parent=1 // pred_region
      %s43 = ssub.s32 4096, 4096
      %44 = vsyncadd [#allocation6], %s43
      %s45 = sshll.u32 [#allocation7], 4
      %s46 = int_to_ptr.vmem [resolvable:$true] %s45
      %51 = dma.hbm_to_vmem [thread:$0]  %s3, 4096, %s46, [#allocation6], 128, 128, 8
    $region17: #{tpu_custom_call.1} parent=1 // pred_fallthru
      _
    // Predicated region
    $region18: #{tpu_custom_call.1} parent=1 // pred_check
      _
    $region19: #{tpu_custom_call.1} parent=1 // pred_check_branch
      %53 = sbr.rel (0) target = $region21
    $region20: #{tpu_custom_call.1} parent=1 // pred_region
      _
    $region21: #{tpu_custom_call.1} parent=1 // pred_fallthru
      _
    // Predicated region
    $region22: #{tpu_custom_call.1} parent=1 // pred_check
      _
    $region23: #{tpu_custom_call.1} parent=1 // pred_check_branch
      %55 = sbr.rel (0) target = $region25
    $region24: #{tpu_custom_call.1} parent=1 // pred_region
      %s57 = ssub.s32 2048, 2048
      %58 = vsyncadd [#allocation9], %s57
      %s59 = sshll.u32 [#allocation8], 4
      %s60 = int_to_ptr.vmem [resolvable:$true] %s59
      %65 = dma.hbm_to_vmem [thread:$0]  %s5, 2048, %s60, [#allocation9], 64, 64, 4
    $region25: #{tpu_custom_call.1} parent=1 // pred_fallthru
      _
    // Predicated region
    $region26: #{tpu_custom_call.1} parent=1 // pred_check
      _
    $region27: #{tpu_custom_call.1} parent=1 // pred_check_branch
      %67 = sbr.rel (0) target = $region29
    $region28: #{tpu_custom_call.1} parent=1 // pred_region
      _
    $region29: #{tpu_custom_call.1} parent=1 // pred_fallthru
      _
    // Predicated region
    $region30: #{tpu_custom_call.1} parent=1 // pred_check
      _
    $region31: #{tpu_custom_call.1} parent=1 // pred_check_branch
      %69 = sbr.rel (0) target = $region33
    $region32: #{tpu_custom_call.1} parent=1 // pred_region
      %70 = dma.done [#allocation3], 448
    $region33: #{tpu_custom_call.1} parent=1 // pred_fallthru
      _
    // Predicated region
    $region34: #{tpu_custom_call.1} parent=1 // pred_check
      _
    $region35: #{tpu_custom_call.1} parent=1 // pred_check_branch
      %72 = sbr.rel (0) target = $region37
    $region36: #{tpu_custom_call.1} parent=1 // pred_region
      %73 = dma.done [#allocation6], 14336
    $region37: #{tpu_custom_call.1} parent=1 // pred_fallthru
      _
    // Predicated region
    $region38: #{tpu_custom_call.1} parent=1 // pred_check
      _
    $region39: #{tpu_custom_call.1} parent=1 // pred_check_branch
      %75 = sbr.rel (0) target = $region41
    $region40: #{tpu_custom_call.1} parent=1 // pred_region
      %76 = dma.done [#allocation6], 4096
    $region41: #{tpu_custom_call.1} parent=1 // pred_fallthru
      _
    // Predicated region
    $region42: #{tpu_custom_call.1} parent=1 // pred_check
      _
    $region43: #{tpu_custom_call.1} parent=1 // pred_check_branch
      %78 = sbr.rel (0) target = $region45
    $region44: #{tpu_custom_call.1} parent=1 // pred_region
      %79 = dma.done [#allocation9], 2048
    $region45: #{tpu_custom_call.1} parent=1 // pred_fallthru
      _
    %v81 = vld [vmem:[#allocation2] sm:$0xff]
    %v82 = vld [vmem:[#allocation2 + $0x8] sm:$0xff]
    %v83 = vld [vmem:[#allocation2 + $0x10] sm:$0xff]
    %v84 = vld [vmem:[#allocation2 + $0x18] sm:$0xf]
    %v85 = vld [vmem:[#allocation5] sm:$0xff]
    %v86 = vld [vmem:[#allocation5 + $0x8] sm:$0xff]
    %v87 = vld [vmem:[#allocation5 + $0x10] sm:$0xff]
    %v88 = vld [vmem:[#allocation5 + $0x18] sm:$0xff]
    %v89 = vld [vmem:[#allocation5 + $0x20] sm:$0xff]
    %v90 = vld [vmem:[#allocation5 + $0x28] sm:$0xff]
    %v91 = vld [vmem:[#allocation5 + $0x30] sm:$0xff]
    %v92 = vld [vmem:[#allocation5 + $0x38] sm:$0xff]
    %v93 = vld [vmem:[#allocation5 + $0x40] sm:$0xff]
    %v94 = vld [vmem:[#allocation5 + $0x48] sm:$0xff]
    %v95 = vld [vmem:[#allocation5 + $0x50] sm:$0xff]
    %v96 = vld [vmem:[#allocation5 + $0x58] sm:$0xff]
    %v97 = vld [vmem:[#allocation5 + $0x60] sm:$0xff]
    %v98 = vld [vmem:[#allocation5 + $0x68] sm:$0xff]
    %v99 = vld [vmem:[#allocation5 + $0x70] sm:$0xff]
    %v100 = vld [vmem:[#allocation5 + $0x78] sm:$0xff]
    %v101 = vld [vmem:[#allocation5 + $0x80] sm:$0xff]
    %v102 = vld [vmem:[#allocation5 + $0x88] sm:$0xff]
    %v103 = vld [vmem:[#allocation5 + $0x90] sm:$0xff]
    %v104 = vld [vmem:[#allocation5 + $0x98] sm:$0xff]
    %v105 = vld [vmem:[#allocation5 + $0xa0] sm:$0xff]
    %v106 = vld [vmem:[#allocation5 + $0xa8] sm:$0xff]
    %v107 = vld [vmem:[#allocation5 + $0xb0] sm:$0xff]
    %v108 = vld [vmem:[#allocation5 + $0xb8] sm:$0xff]
    %v109 = vld [vmem:[#allocation5 + $0xc0] sm:$0xff]
    %v110 = vld [vmem:[#allocation5 + $0xc8] sm:$0xff]
    %v111 = vld [vmem:[#allocation5 + $0xd0] sm:$0xff]
    %v112 = vld [vmem:[#allocation5 + $0xd8] sm:$0xff]
    %v113 = vld [vmem:[#allocation5 + $0xe0] sm:$0xff]
    %v114 = vld [vmem:[#allocation5 + $0xe8] sm:$0xff]
    %v115 = vld [vmem:[#allocation5 + $0xf0] sm:$0xff]
    %v116 = vld [vmem:[#allocation5 + $0xf8] sm:$0xff]
    %v117 = vld [vmem:[#allocation5 + $0x100] sm:$0xff]
    %v118 = vld [vmem:[#allocation5 + $0x108] sm:$0xff]
    %v119 = vld [vmem:[#allocation5 + $0x110] sm:$0xff]
    %v120 = vld [vmem:[#allocation5 + $0x118] sm:$0xff]
    %v121 = vld [vmem:[#allocation5 + $0x120] sm:$0xff]
    %v122 = vld [vmem:[#allocation5 + $0x128] sm:$0xff]
    %v123 = vld [vmem:[#allocation5 + $0x130] sm:$0xff]
    %v124 = vld [vmem:[#allocation5 + $0x138] sm:$0xff]
    %v125 = vld [vmem:[#allocation5 + $0x140] sm:$0xff]
    %v126 = vld [vmem:[#allocation5 + $0x148] sm:$0xff]
    %v127 = vld [vmem:[#allocation5 + $0x150] sm:$0xff]
    %v128 = vld [vmem:[#allocation5 + $0x158] sm:$0xff]
    %v129 = vld [vmem:[#allocation5 + $0x160] sm:$0xff]
    %v130 = vld [vmem:[#allocation5 + $0x168] sm:$0xff]
    %v131 = vld [vmem:[#allocation5 + $0x170] sm:$0xff]
    %v132 = vld [vmem:[#allocation5 + $0x178] sm:$0xff]
    %v133 = vld [vmem:[#allocation5 + $0x180] sm:$0xff]
    %v134 = vld [vmem:[#allocation5 + $0x188] sm:$0xff]
    %v135 = vld [vmem:[#allocation5 + $0x190] sm:$0xff]
    %v136 = vld [vmem:[#allocation5 + $0x198] sm:$0xff]
    %v137 = vld [vmem:[#allocation5 + $0x1a0] sm:$0xff]
    %v138 = vld [vmem:[#allocation5 + $0x1a8] sm:$0xff]
    %v139 = vld [vmem:[#allocation5 + $0x1b0] sm:$0xff]
    %v140 = vld [vmem:[#allocation5 + $0x1b8] sm:$0xff]
    %v141 = vld [vmem:[#allocation5 + $0x1c0] sm:$0xff]
    %v142 = vld [vmem:[#allocation5 + $0x1c8] sm:$0xff]
    %v143 = vld [vmem:[#allocation5 + $0x1d0] sm:$0xff]
    %v144 = vld [vmem:[#allocation5 + $0x1d8] sm:$0xff]
    %v145 = vld [vmem:[#allocation5 + $0x1e0] sm:$0xff]
    %v146 = vld [vmem:[#allocation5 + $0x1e8] sm:$0xff]
    %v147 = vld [vmem:[#allocation5 + $0x1f0] sm:$0xff]
    %v148 = vld [vmem:[#allocation5 + $0x1f8] sm:$0xff]
    %v149 = vld [vmem:[#allocation5 + $0x200] sm:$0xff]
    %v150 = vld [vmem:[#allocation5 + $0x208] sm:$0xff]
    %v151 = vld [vmem:[#allocation5 + $0x210] sm:$0xff]
    %v152 = vld [vmem:[#allocation5 + $0x218] sm:$0xff]
    %v153 = vld [vmem:[#allocation5 + $0x220] sm:$0xff]
    %v154 = vld [vmem:[#allocation5 + $0x228] sm:$0xff]
    %v155 = vld [vmem:[#allocation5 + $0x230] sm:$0xff]
    %v156 = vld [vmem:[#allocation5 + $0x238] sm:$0xff]
    %v157 = vld [vmem:[#allocation5 + $0x240] sm:$0xff]
    %v158 = vld [vmem:[#allocation5 + $0x248] sm:$0xff]
    %v159 = vld [vmem:[#allocation5 + $0x250] sm:$0xff]
    %v160 = vld [vmem:[#allocation5 + $0x258] sm:$0xff]
    %v161 = vld [vmem:[#allocation5 + $0x260] sm:$0xff]
    %v162 = vld [vmem:[#allocation5 + $0x268] sm:$0xff]
    %v163 = vld [vmem:[#allocation5 + $0x270] sm:$0xff]
    %v164 = vld [vmem:[#allocation5 + $0x278] sm:$0xff]
    %v165 = vld [vmem:[#allocation5 + $0x280] sm:$0xff]
    %v166 = vld [vmem:[#allocation5 + $0x288] sm:$0xff]
    %v167 = vld [vmem:[#allocation5 + $0x290] sm:$0xff]
    %v168 = vld [vmem:[#allocation5 + $0x298] sm:$0xff]
    %v169 = vld [vmem:[#allocation5 + $0x2a0] sm:$0xff]
    %v170 = vld [vmem:[#allocation5 + $0x2a8] sm:$0xff]
    %v171 = vld [vmem:[#allocation5 + $0x2b0] sm:$0xff]
    %v172 = vld [vmem:[#allocation5 + $0x2b8] sm:$0xff]
    %v173 = vld [vmem:[#allocation5 + $0x2c0] sm:$0xff]
    %v174 = vld [vmem:[#allocation5 + $0x2c8] sm:$0xff]
    %v175 = vld [vmem:[#allocation5 + $0x2d0] sm:$0xff]
    %v176 = vld [vmem:[#allocation5 + $0x2d8] sm:$0xff]
    %v177 = vld [vmem:[#allocation5 + $0x2e0] sm:$0xff]
    %v178 = vld [vmem:[#allocation5 + $0x2e8] sm:$0xff]
    %v179 = vld [vmem:[#allocation5 + $0x2f0] sm:$0xff]
    %v180 = vld [vmem:[#allocation5 + $0x2f8] sm:$0xff]
    %v181 = vld [vmem:[#allocation5 + $0x300] sm:$0xff]
    %v182 = vld [vmem:[#allocation5 + $0x308] sm:$0xff]
    %v183 = vld [vmem:[#allocation5 + $0x310] sm:$0xff]
    %v184 = vld [vmem:[#allocation5 + $0x318] sm:$0xff]
    %v185 = vld [vmem:[#allocation5 + $0x320] sm:$0xff]
    %v186 = vld [vmem:[#allocation5 + $0x328] sm:$0xff]
    %v187 = vld [vmem:[#allocation5 + $0x330] sm:$0xff]
    %v188 = vld [vmem:[#allocation5 + $0x338] sm:$0xff]
    %v189 = vld [vmem:[#allocation5 + $0x340] sm:$0xff]
    %v190 = vld [vmem:[#allocation5 + $0x348] sm:$0xff]
    %v191 = vld [vmem:[#allocation5 + $0x350] sm:$0xff]
    %v192 = vld [vmem:[#allocation5 + $0x358] sm:$0xff]
    %v193 = vld [vmem:[#allocation5 + $0x360] sm:$0xff]
    %v194 = vld [vmem:[#allocation5 + $0x368] sm:$0xff]
    %v195 = vld [vmem:[#allocation5 + $0x370] sm:$0xff]
    %v196 = vld [vmem:[#allocation5 + $0x378] sm:$0xff]
    %v197 = vld [vmem:[%s2] sm:$0x3]
    %v199 = vlaneseq
    %v200 = vshrl.u32 %v199, 7
    %v201 = vsub.s32 0, %v200
    %v202 = vrot.slane %v197, %v201
    %v203 = vlaneseq
    %v204 = vshrl.u32 %v203, 7
    %v205 = vsub.s32 1, %v204
    %v206 = vrot.slane %v197, %v205
    %v213 = vunpack.c.l.b16 %v81
    %v214 = vunpack.c.h.b16 %v81
    %v215 = vunpack.c.l.b16 %v82
    %v216 = vunpack.c.h.b16 %v82
    %v217 = vunpack.c.l.b16 %v83
    %v218 = vunpack.c.h.b16 %v83
    %v219 = vunpack.c.l.b16 %v84
    %v220 = vpack.c.b16 %v213, %v213
    %v221 = vpack.c.b16 %v214, %v214
    %v222 = vpack.c.b16 %v215, %v215
    %v223 = vpack.c.b16 %v216, %v216
    %v224 = vpack.c.b16 %v217, %v217
    %v225 = vpack.c.b16 %v218, %v218
    %v226 = vpack.c.b16 %v219, %v219
    %v346 = vunpack.c.l.b16 %v85
    %v347 = vunpack.c.h.b16 %v85
    %v348 = vunpack.c.l.b16 %v86
    %v349 = vunpack.c.h.b16 %v86
    %v350 = vunpack.c.l.b16 %v87
    %v351 = vunpack.c.h.b16 %v87
    %v352 = vunpack.c.l.b16 %v88
    %v353 = vunpack.c.h.b16 %v88
    %v354 = vunpack.c.l.b16 %v89
    %v355 = vunpack.c.h.b16 %v89
    %v356 = vunpack.c.l.b16 %v90
    %v357 = vunpack.c.h.b16 %v90
    %v358 = vunpack.c.l.b16 %v91
    %v359 = vunpack.c.h.b16 %v91
    %v360 = vunpack.c.l.b16 %v92
    %v361 = vunpack.c.h.b16 %v92
    %v362 = vunpack.c.l.b16 %v93
    %v363 = vunpack.c.h.b16 %v93
    %v364 = vunpack.c.l.b16 %v94
    %v365 = vunpack.c.h.b16 %v94
    %v366 = vunpack.c.l.b16 %v95
    %v367 = vunpack.c.h.b16 %v95
    %v368 = vunpack.c.l.b16 %v96
    %v369 = vunpack.c.h.b16 %v96
    %v370 = vunpack.c.l.b16 %v97
    %v371 = vunpack.c.h.b16 %v97
    %v372 = vunpack.c.l.b16 %v98
    %v373 = vunpack.c.h.b16 %v98
    %v374 = vunpack.c.l.b16 %v99
    %v375 = vunpack.c.h.b16 %v99
    %v376 = vunpack.c.l.b16 %v100
    %v377 = vunpack.c.h.b16 %v100
    %v378 = vunpack.c.l.b16 %v101
    %v379 = vunpack.c.h.b16 %v101
    %v380 = vunpack.c.l.b16 %v102
    %v381 = vunpack.c.h.b16 %v102
    %v382 = vunpack.c.l.b16 %v103
    %v383 = vunpack.c.h.b16 %v103
    %v384 = vunpack.c.l.b16 %v104
    %v385 = vunpack.c.h.b16 %v104
    %v386 = vunpack.c.l.b16 %v105
    %v387 = vunpack.c.h.b16 %v105
    %v388 = vunpack.c.l.b16 %v106
    %v389 = vunpack.c.h.b16 %v106
    %v390 = vunpack.c.l.b16 %v107
    %v391 = vunpack.c.h.b16 %v107
    %v392 = vunpack.c.l.b16 %v108
    %v393 = vunpack.c.h.b16 %v108
    %v394 = vunpack.c.l.b16 %v109
    %v395 = vunpack.c.h.b16 %v109
    %v396 = vunpack.c.l.b16 %v110
    %v397 = vunpack.c.h.b16 %v110
    %v398 = vunpack.c.l.b16 %v111
    %v399 = vunpack.c.h.b16 %v111
    %v400 = vunpack.c.l.b16 %v112
    %v401 = vunpack.c.h.b16 %v112
    %v402 = vunpack.c.l.b16 %v113
    %v403 = vunpack.c.h.b16 %v113
    %v404 = vunpack.c.l.b16 %v114
    %v405 = vunpack.c.h.b16 %v114
    %v406 = vunpack.c.l.b16 %v115
    %v407 = vunpack.c.h.b16 %v115
    %v408 = vunpack.c.l.b16 %v116
    %v409 = vunpack.c.h.b16 %v116
    %v410 = vunpack.c.l.b16 %v117
    %v411 = vunpack.c.h.b16 %v117
    %v412 = vunpack.c.l.b16 %v118
    %v413 = vunpack.c.h.b16 %v118
    %v414 = vunpack.c.l.b16 %v119
    %v415 = vunpack.c.h.b16 %v119
    %v416 = vunpack.c.l.b16 %v120
    %v417 = vunpack.c.h.b16 %v120
    %v418 = vunpack.c.l.b16 %v121
    %v419 = vunpack.c.h.b16 %v121
    %v420 = vunpack.c.l.b16 %v122
    %v421 = vunpack.c.h.b16 %v122
    %v422 = vunpack.c.l.b16 %v123
    %v423 = vunpack.c.h.b16 %v123
    %v424 = vunpack.c.l.b16 %v124
    %v425 = vunpack.c.h.b16 %v124
    %v426 = vunpack.c.l.b16 %v125
    %v427 = vunpack.c.h.b16 %v125
    %v428 = vunpack.c.l.b16 %v126
    %v429 = vunpack.c.h.b16 %v126
    %v430 = vunpack.c.l.b16 %v127
    %v431 = vunpack.c.h.b16 %v127
    %v432 = vunpack.c.l.b16 %v128
    %v433 = vunpack.c.h.b16 %v128
    %v434 = vunpack.c.l.b16 %v129
    %v435 = vunpack.c.h.b16 %v129
    %v436 = vunpack.c.l.b16 %v130
    %v437 = vunpack.c.h.b16 %v130
    %v438 = vunpack.c.l.b16 %v131
    %v439 = vunpack.c.h.b16 %v131
    %v440 = vunpack.c.l.b16 %v132
    %v441 = vunpack.c.h.b16 %v132
    %v442 = vunpack.c.l.b16 %v133
    %v443 = vunpack.c.h.b16 %v133
    %v444 = vunpack.c.l.b16 %v134
    %v445 = vunpack.c.h.b16 %v134
    %v446 = vunpack.c.l.b16 %v135
    %v447 = vunpack.c.h.b16 %v135
    %v448 = vunpack.c.l.b16 %v136
    %v449 = vunpack.c.h.b16 %v136
    %v450 = vunpack.c.l.b16 %v137
    %v451 = vunpack.c.h.b16 %v137
    %v452 = vunpack.c.l.b16 %v138
    %v453 = vunpack.c.h.b16 %v138
    %v454 = vunpack.c.l.b16 %v139
    %v455 = vunpack.c.h.b16 %v139
    %v456 = vunpack.c.l.b16 %v140
    %v457 = vunpack.c.h.b16 %v140
    %v458 = vunpack.c.l.b16 %v141
    %v459 = vunpack.c.h.b16 %v141
    %v460 = vunpack.c.l.b16 %v142
    %v461 = vunpack.c.h.b16 %v142
    %v462 = vunpack.c.l.b16 %v143
    %v463 = vunpack.c.h.b16 %v143
    %v464 = vunpack.c.l.b16 %v144
    %v465 = vunpack.c.h.b16 %v144
    %v466 = vunpack.c.l.b16 %v145
    %v467 = vunpack.c.h.b16 %v145
    %v468 = vunpack.c.l.b16 %v146
    %v469 = vunpack.c.h.b16 %v146
    %v470 = vunpack.c.l.b16 %v147
    %v471 = vunpack.c.h.b16 %v147
    %v472 = vunpack.c.l.b16 %v148
    %v473 = vunpack.c.h.b16 %v148
    %v474 = vunpack.c.l.b16 %v149
    %v475 = vunpack.c.h.b16 %v149
    %v476 = vunpack.c.l.b16 %v150
    %v477 = vunpack.c.h.b16 %v150
    %v478 = vunpack.c.l.b16 %v151
    %v479 = vunpack.c.h.b16 %v151
    %v480 = vunpack.c.l.b16 %v152
    %v481 = vunpack.c.h.b16 %v152
    %v482 = vunpack.c.l.b16 %v153
    %v483 = vunpack.c.h.b16 %v153
    %v484 = vunpack.c.l.b16 %v154
    %v485 = vunpack.c.h.b16 %v154
    %v486 = vunpack.c.l.b16 %v155
    %v487 = vunpack.c.h.b16 %v155
    %v488 = vunpack.c.l.b16 %v156
    %v489 = vunpack.c.h.b16 %v156
    %v490 = vunpack.c.l.b16 %v157
    %v491 = vunpack.c.h.b16 %v157
    %v492 = vunpack.c.l.b16 %v158
    %v493 = vunpack.c.h.b16 %v158
    %v494 = vunpack.c.l.b16 %v159
    %v495 = vunpack.c.h.b16 %v159
    %v496 = vunpack.c.l.b16 %v160
    %v497 = vunpack.c.h.b16 %v160
    %v498 = vunpack.c.l.b16 %v161
    %v499 = vunpack.c.h.b16 %v161
    %v500 = vunpack.c.l.b16 %v162
    %v501 = vunpack.c.h.b16 %v162
    %v502 = vunpack.c.l.b16 %v163
    %v503 = vunpack.c.h.b16 %v163
    %v504 = vunpack.c.l.b16 %v164
    %v505 = vunpack.c.h.b16 %v164
    %v506 = vunpack.c.l.b16 %v165
    %v507 = vunpack.c.h.b16 %v165
    %v508 = vunpack.c.l.b16 %v166
    %v509 = vunpack.c.h.b16 %v166
    %v510 = vunpack.c.l.b16 %v167
    %v511 = vunpack.c.h.b16 %v167
    %v512 = vunpack.c.l.b16 %v168
    %v513 = vunpack.c.h.b16 %v168
    %v514 = vunpack.c.l.b16 %v169
    %v515 = vunpack.c.h.b16 %v169
    %v516 = vunpack.c.l.b16 %v170
    %v517 = vunpack.c.h.b16 %v170
    %v518 = vunpack.c.l.b16 %v171
    %v519 = vunpack.c.h.b16 %v171
    %v520 = vunpack.c.l.b16 %v172
    %v521 = vunpack.c.h.b16 %v172
    %v522 = vunpack.c.l.b16 %v173
    %v523 = vunpack.c.h.b16 %v173
    %v524 = vunpack.c.l.b16 %v174
    %v525 = vunpack.c.h.b16 %v174
    %v526 = vunpack.c.l.b16 %v175
    %v527 = vunpack.c.h.b16 %v175
    %v528 = vunpack.c.l.b16 %v176
    %v529 = vunpack.c.h.b16 %v176
    %v530 = vunpack.c.l.b16 %v177
    %v531 = vunpack.c.h.b16 %v177
    %v532 = vunpack.c.l.b16 %v178
    %v533 = vunpack.c.h.b16 %v178
    %v534 = vunpack.c.l.b16 %v179
    %v535 = vunpack.c.h.b16 %v179
    %v536 = vunpack.c.l.b16 %v180
    %v537 = vunpack.c.h.b16 %v180
    %v538 = vunpack.c.l.b16 %v181
    %v539 = vunpack.c.h.b16 %v181
    %v540 = vunpack.c.l.b16 %v182
    %v541 = vunpack.c.h.b16 %v182
    %v542 = vunpack.c.l.b16 %v183
    %v543 = vunpack.c.h.b16 %v183
    %v544 = vunpack.c.l.b16 %v184
    %v545 = vunpack.c.h.b16 %v184
    %v546 = vunpack.c.l.b16 %v185
    %v547 = vunpack.c.h.b16 %v185
    %v548 = vunpack.c.l.b16 %v186
    %v549 = vunpack.c.h.b16 %v186
    %v550 = vunpack.c.l.b16 %v187
    %v551 = vunpack.c.h.b16 %v187
    %v552 = vunpack.c.l.b16 %v188
    %v553 = vunpack.c.h.b16 %v188
    %v554 = vunpack.c.l.b16 %v189
    %v555 = vunpack.c.h.b16 %v189
    %v556 = vunpack.c.l.b16 %v190
    %v557 = vunpack.c.h.b16 %v190
    %v558 = vunpack.c.l.b16 %v191
    %v559 = vunpack.c.h.b16 %v191
    %v560 = vunpack.c.l.b16 %v192
    %v561 = vunpack.c.h.b16 %v192
    %v562 = vunpack.c.l.b16 %v193
    %v563 = vunpack.c.h.b16 %v193
    %v564 = vunpack.c.l.b16 %v194
    %v565 = vunpack.c.h.b16 %v194
    %v566 = vunpack.c.l.b16 %v195
    %v567 = vunpack.c.h.b16 %v195
    %v568 = vunpack.c.l.b16 %v196
    %v569 = vunpack.c.h.b16 %v196
    %v570 = vpack.c.b16 %v348, %v346
    %v571 = vpack.c.b16 %v349, %v347
    %v572 = vpack.c.b16 %v352, %v350
    %v573 = vpack.c.b16 %v353, %v351
    %v574 = vpack.c.b16 %v356, %v354
    %v575 = vpack.c.b16 %v357, %v355
    %v576 = vpack.c.b16 %v360, %v358
    %v577 = vpack.c.b16 %v361, %v359
    %v578 = vpack.c.b16 %v364, %v362
    %v579 = vpack.c.b16 %v365, %v363
    %v580 = vpack.c.b16 %v368, %v366
    %v581 = vpack.c.b16 %v369, %v367
    %v582 = vpack.c.b16 %v372, %v370
    %v583 = vpack.c.b16 %v373, %v371
    %v584 = vpack.c.b16 %v376, %v374
    %v585 = vpack.c.b16 %v377, %v375
    %v586 = vpack.c.b16 %v380, %v378
    %v587 = vpack.c.b16 %v381, %v379
    %v588 = vpack.c.b16 %v384, %v382
    %v589 = vpack.c.b16 %v385, %v383
    %v590 = vpack.c.b16 %v388, %v386
    %v591 = vpack.c.b16 %v389, %v387
    %v592 = vpack.c.b16 %v392, %v390
    %v593 = vpack.c.b16 %v393, %v391
    %v594 = vpack.c.b16 %v396, %v394
    %v595 = vpack.c.b16 %v397, %v395
    %v596 = vpack.c.b16 %v400, %v398
    %v597 = vpack.c.b16 %v401, %v399
    %v598 = vpack.c.b16 %v404, %v402
    %v599 = vpack.c.b16 %v405, %v403
    %v600 = vpack.c.b16 %v408, %v406
    %v601 = vpack.c.b16 %v409, %v407
    %v602 = vpack.c.b16 %v412, %v410
    %v603 = vpack.c.b16 %v413, %v411
    %v604 = vpack.c.b16 %v416, %v414
    %v605 = vpack.c.b16 %v417, %v415
    %v606 = vpack.c.b16 %v420, %v418
    %v607 = vpack.c.b16 %v421, %v419
    %v608 = vpack.c.b16 %v424, %v422
    %v609 = vpack.c.b16 %v425, %v423
    %v610 = vpack.c.b16 %v428, %v426
    %v611 = vpack.c.b16 %v429, %v427
    %v612 = vpack.c.b16 %v432, %v430
    %v613 = vpack.c.b16 %v433, %v431
    %v614 = vpack.c.b16 %v436, %v434
    %v615 = vpack.c.b16 %v437, %v435
    %v616 = vpack.c.b16 %v440, %v438
    %v617 = vpack.c.b16 %v441, %v439
    %v618 = vpack.c.b16 %v444, %v442
    %v619 = vpack.c.b16 %v445, %v443
    %v620 = vpack.c.b16 %v448, %v446
    %v621 = vpack.c.b16 %v449, %v447
    %v622 = vpack.c.b16 %v452, %v450
    %v623 = vpack.c.b16 %v453, %v451
    %v624 = vpack.c.b16 %v456, %v454
    %v625 = vpack.c.b16 %v457, %v455
    %v626 = vpack.c.b16 %v460, %v458
    %v627 = vpack.c.b16 %v461, %v459
    %v628 = vpack.c.b16 %v464, %v462
    %v629 = vpack.c.b16 %v465, %v463
    %v630 = vpack.c.b16 %v468, %v466
    %v631 = vpack.c.b16 %v469, %v467
    %v632 = vpack.c.b16 %v472, %v470
    %v633 = vpack.c.b16 %v473, %v471
    %v634 = vpack.c.b16 %v476, %v474
    %v635 = vpack.c.b16 %v477, %v475
    %v636 = vpack.c.b16 %v480, %v478
    %v637 = vpack.c.b16 %v481, %v479
    %v638 = vpack.c.b16 %v484, %v482
    %v639 = vpack.c.b16 %v485, %v483
    %v640 = vpack.c.b16 %v488, %v486
    %v641 = vpack.c.b16 %v489, %v487
    %v642 = vpack.c.b16 %v492, %v490
    %v643 = vpack.c.b16 %v493, %v491
    %v644 = vpack.c.b16 %v496, %v494
    %v645 = vpack.c.b16 %v497, %v495
    %v646 = vpack.c.b16 %v500, %v498
    %v647 = vpack.c.b16 %v501, %v499
    %v648 = vpack.c.b16 %v504, %v502
    %v649 = vpack.c.b16 %v505, %v503
    %v650 = vpack.c.b16 %v508, %v506
    %v651 = vpack.c.b16 %v509, %v507
    %v652 = vpack.c.b16 %v512, %v510
    %v653 = vpack.c.b16 %v513, %v511
    %v654 = vpack.c.b16 %v516, %v514
    %v655 = vpack.c.b16 %v517, %v515
    %v656 = vpack.c.b16 %v520, %v518
    %v657 = vpack.c.b16 %v521, %v519
    %v658 = vpack.c.b16 %v524, %v522
    %v659 = vpack.c.b16 %v525, %v523
    %v660 = vpack.c.b16 %v528, %v526
    %v661 = vpack.c.b16 %v529, %v527
    %v662 = vpack.c.b16 %v532, %v530
    %v663 = vpack.c.b16 %v533, %v531
    %v664 = vpack.c.b16 %v536, %v534
    %v665 = vpack.c.b16 %v537, %v535
    %v666 = vpack.c.b16 %v540, %v538
    %v667 = vpack.c.b16 %v541, %v539
    %v668 = vpack.c.b16 %v544, %v542
    %v669 = vpack.c.b16 %v545, %v543
    %v670 = vpack.c.b16 %v548, %v546
    %v671 = vpack.c.b16 %v549, %v547
    %v672 = vpack.c.b16 %v552, %v550
    %v673 = vpack.c.b16 %v553, %v551
    %v674 = vpack.c.b16 %v556, %v554
    %v675 = vpack.c.b16 %v557, %v555
    %v676 = vpack.c.b16 %v560, %v558
    %v677 = vpack.c.b16 %v561, %v559
    %v678 = vpack.c.b16 %v564, %v562
    %v679 = vpack.c.b16 %v565, %v563
    %v680 = vpack.c.b16 %v568, %v566
    %v681 = vpack.c.b16 %v569, %v567
    %794 = vmatprep.subr.bf16.mxu0 %v571
    %795 = vmatpush1.bf16.msra.mxu0 %v570
    %796 = vmatprep.subr.bf16.mxu0 %v573
    %797 = vmatpush1.bf16.msra.mxu0 %v572
    %798 = vmatprep.subr.bf16.mxu0 %v575
    %799 = vmatpush1.bf16.msra.mxu0 %v574
    %800 = vmatprep.subr.bf16.mxu0 %v577
    %801 = vmatpush1.bf16.msra.mxu0 %v576
    %802 = vmatprep.subr.bf16.mxu0 %v579
    %803 = vmatpush1.bf16.msra.mxu0 %v578
    %804 = vmatprep.subr.bf16.mxu0 %v581
    %805 = vmatpush1.bf16.msra.mxu0 %v580
    %806 = vmatprep.subr.bf16.mxu0 %v583
    %807 = vmatpush1.bf16.msra.mxu0 %v582
    %808 = vmatprep.subr.bf16.mxu0 %v585
    %809 = vmatpush1.bf16.msra.mxu0 %v584
    %810 = vmatprep.subr.bf16.mxu0 %v587
    %811 = vmatpush1.bf16.msra.mxu0 %v586
    %812 = vmatprep.subr.bf16.mxu0 %v589
    %813 = vmatpush1.bf16.msra.mxu0 %v588
    %814 = vmatprep.subr.bf16.mxu0 %v591
    %815 = vmatpush1.bf16.msra.mxu0 %v590
    %816 = vmatprep.subr.bf16.mxu0 %v593
    %817 = vmatpush1.bf16.msra.mxu0 %v592
    %818 = vmatprep.subr.bf16.mxu0 %v595
    %819 = vmatpush1.bf16.msra.mxu0 %v594
    %820 = vmatprep.subr.bf16.mxu0 %v597
    %821 = vmatpush1.bf16.msra.mxu0 %v596
    %822 = vmatprep.subr.bf16.mxu0 %v599
    %823 = vmatpush1.bf16.msra.mxu0 %v598
    %824 = vmatprep.subr.bf16.mxu0 %v601
    %825 = vmatpush1.bf16.msra.mxu0 %v600
    %826 = vmatprep.mubr.bf16.mxu0 %v221
    %827 = vmatmul.mubr.bf16.gmra.mrb[0].mxu0 %v220
    %v828 = vpop.f32.mrb[0].mxu0
    %v829 = vadd.f32 %v202, %v828
    %v830 = vpop.f32.mrb[0].mxu0
    %v831 = vadd.f32 %v206, %v830
    %v832 = vpop.f32.mrb[0].mxu0
    %v833 = vpop.f32.mrb[0].mxu0
    %834 = vdwg.mxu0
    %835 = vmatprep.subr.bf16.mxu0 %v603
    %836 = vmatpush1.bf16.msra.mxu0 %v602
    %837 = vmatprep.subr.bf16.mxu0 %v605
    %838 = vmatpush1.bf16.msra.mxu0 %v604
    %839 = vmatprep.subr.bf16.mxu0 %v607
    %840 = vmatpush1.bf16.msra.mxu0 %v606
    %841 = vmatprep.subr.bf16.mxu0 %v609
    %842 = vmatpush1.bf16.msra.mxu0 %v608
    %843 = vmatprep.subr.bf16.mxu0 %v611
    %844 = vmatpush1.bf16.msra.mxu0 %v610
    %845 = vmatprep.subr.bf16.mxu0 %v613
    %846 = vmatpush1.bf16.msra.mxu0 %v612
    %847 = vmatprep.subr.bf16.mxu0 %v615
    %848 = vmatpush1.bf16.msra.mxu0 %v614
    %849 = vmatprep.subr.bf16.mxu0 %v617
    %850 = vmatpush1.bf16.msra.mxu0 %v616
    %851 = vmatprep.subr.bf16.mxu0 %v619
    %852 = vmatpush1.bf16.msra.mxu0 %v618
    %853 = vmatprep.subr.bf16.mxu0 %v621
    %854 = vmatpush1.bf16.msra.mxu0 %v620
    %855 = vmatprep.subr.bf16.mxu0 %v623
    %856 = vmatpush1.bf16.msra.mxu0 %v622
    %857 = vmatprep.subr.bf16.mxu0 %v625
    %858 = vmatpush1.bf16.msra.mxu0 %v624
    %859 = vmatprep.subr.bf16.mxu0 %v627
    %860 = vmatpush1.bf16.msra.mxu0 %v626
    %861 = vmatprep.subr.bf16.mxu0 %v629
    %862 = vmatpush1.bf16.msra.mxu0 %v628
    %863 = vmatprep.subr.bf16.mxu0 %v631
    %864 = vmatpush1.bf16.msra.mxu0 %v630
    %865 = vmatprep.subr.bf16.mxu0 %v633
    %866 = vmatpush1.bf16.msra.mxu0 %v632
    %867 = vmatprep.mubr.bf16.mxu0 %v223
    %868 = vmatmul.mubr.bf16.gmra.mrb[0].mxu0 %v222
    %v869 = vpop.f32.mrb[0].mxu0
    %v870 = vadd.f32 %v829, %v869
    %v871 = vpop.f32.mrb[0].mxu0
    %v872 = vadd.f32 %v831, %v871
    %v873 = vpop.f32.mrb[0].mxu0
    %v874 = vpop.f32.mrb[0].mxu0
    %875 = vdwg.mxu0
    %876 = vmatprep.subr.bf16.mxu0 %v635
    %877 = vmatpush1.bf16.msra.mxu0 %v634
    %878 = vmatprep.subr.bf16.mxu0 %v637
    %879 = vmatpush1.bf16.msra.mxu0 %v636
    %880 = vmatprep.subr.bf16.mxu0 %v639
    %881 = vmatpush1.bf16.msra.mxu0 %v638
    %882 = vmatprep.subr.bf16.mxu0 %v641
    %883 = vmatpush1.bf16.msra.mxu0 %v640
    %884 = vmatprep.subr.bf16.mxu0 %v643
    %885 = vmatpush1.bf16.msra.mxu0 %v642
    %886 = vmatprep.subr.bf16.mxu0 %v645
    %887 = vmatpush1.bf16.msra.mxu0 %v644
    %888 = vmatprep.subr.bf16.mxu0 %v647
    %889 = vmatpush1.bf16.msra.mxu0 %v646
    %890 = vmatprep.subr.bf16.mxu0 %v649
    %891 = vmatpush1.bf16.msra.mxu0 %v648
    %892 = vmatprep.subr.bf16.mxu0 %v651
    %893 = vmatpush1.bf16.msra.mxu0 %v650
    %894 = vmatprep.subr.bf16.mxu0 %v653
    %895 = vmatpush1.bf16.msra.mxu0 %v652
    %896 = vmatprep.subr.bf16.mxu0 %v655
    %897 = vmatpush1.bf16.msra.mxu0 %v654
    %898 = vmatprep.subr.bf16.mxu0 %v657
    %899 = vmatpush1.bf16.msra.mxu0 %v656
    %900 = vmatprep.subr.bf16.mxu0 %v659
    %901 = vmatpush1.bf16.msra.mxu0 %v658
    %902 = vmatprep.subr.bf16.mxu0 %v661
    %903 = vmatpush1.bf16.msra.mxu0 %v660
    %904 = vmatprep.subr.bf16.mxu0 %v663
    %905 = vmatpush1.bf16.msra.mxu0 %v662
    %906 = vmatprep.subr.bf16.mxu0 %v665
    %907 = vmatpush1.bf16.msra.mxu0 %v664
    %908 = vmatprep.mubr.bf16.mxu0 %v225
    %909 = vmatmul.mubr.bf16.gmra.mrb[0].mxu0 %v224
    %v910 = vpop.f32.mrb[0].mxu0
    %v911 = vadd.f32 %v870, %v910
    %v912 = vpop.f32.mrb[0].mxu0
    %v913 = vadd.f32 %v872, %v912
    %v914 = vpop.f32.mrb[0].mxu0
    %v915 = vpop.f32.mrb[0].mxu0
    %916 = vdwg.mxu0
    %917 = vmatprep.subr.bf16.mxu0 %v667
    %918 = vmatpush1.bf16.msra.mxu0 %v666
    %919 = vmatprep.subr.bf16.mxu0 %v669
    %920 = vmatpush1.bf16.msra.mxu0 %v668
    %921 = vmatprep.subr.bf16.mxu0 %v671
    %922 = vmatpush1.bf16.msra.mxu0 %v670
    %923 = vmatprep.subr.bf16.mxu0 %v673
    %924 = vmatpush1.bf16.msra.mxu0 %v672
    %925 = vmatprep.subr.bf16.mxu0 %v675
    %926 = vmatpush1.bf16.msra.mxu0 %v674
    %927 = vmatprep.subr.bf16.mxu0 %v677
    %928 = vmatpush1.bf16.msra.mxu0 %v676
    %929 = vmatprep.subr.bf16.mxu0 %v679
    %930 = vmatpush1.bf16.msra.mxu0 %v678
    %931 = vmatprep.subr.bf16.mxu0 %v681
    %932 = vmatpush1.bf16.msra.mxu0 %v680
    %933 = vmatprep.subr.bf16.mxu0 0
    %934 = vmatpush1.bf16.msra.mxu0 0
    %935 = vmatprep.subr.bf16.mxu0 0
    %936 = vmatpush1.bf16.msra.mxu0 0
    %937 = vmatprep.subr.bf16.mxu0 0
    %938 = vmatpush1.bf16.msra.mxu0 0
    %939 = vmatprep.subr.bf16.mxu0 0
    %940 = vmatpush1.bf16.msra.mxu0 0
    %941 = vmatprep.subr.bf16.mxu0 0
    %942 = vmatpush1.bf16.msra.mxu0 0
    %943 = vmatprep.subr.bf16.mxu0 0
    %944 = vmatpush1.bf16.msra.mxu0 0
    %945 = vmatprep.subr.bf16.mxu0 0
    %946 = vmatpush1.bf16.msra.mxu0 0
    %947 = vmatprep.subr.bf16.mxu0 0
    %948 = vmatpush1.bf16.msra.mxu0 0
    %949 = vmatprep.mubr.bf16.mxu0 0
    %950 = vmatmul.mubr.bf16.gmra.mrb[0].mxu0 %v226
    %v951 = vpop.f32.mrb[0].mxu0
    %v952 = vadd.f32 %v911, %v951
    %v953 = vpop.f32.mrb[0].mxu0
    %v954 = vadd.f32 %v913, %v953
    %v955 = vpop.f32.mrb[0].mxu0
    %v956 = vpop.f32.mrb[0].mxu0
    %957 = vdwg.mxu0
    %vm958 = vcmp.gt.f32.partialorder %v952, 0.0
    %vm959 = vcmp.gt.f32.partialorder %v954, 0.0
    %v960 = vmul.f32 %v952, 0.01
    %v961 = vmul.f32 %v954, 0.01
    %v962 = vsel %vm958, %v952, %v960
    %v963 = vsel %vm959, %v954, %v961
    %v964 = vpack.c.bf16 %v962, %v962
    %v965 = vpack.c.bf16 %v963, %v963
    %v966 = vld [vmem:[#allocation7] sm:$0xff]
    %v967 = vld [vmem:[#allocation7 + $0x8] sm:$0xff]
    %v968 = vld [vmem:[#allocation7 + $0x10] sm:$0xff]
    %v969 = vld [vmem:[#allocation7 + $0x18] sm:$0xff]
    %v970 = vld [vmem:[#allocation7 + $0x20] sm:$0xff]
    %v971 = vld [vmem:[#allocation7 + $0x28] sm:$0xff]
    %v972 = vld [vmem:[#allocation7 + $0x30] sm:$0xff]
    %v973 = vld [vmem:[#allocation7 + $0x38] sm:$0xff]
    %v974 = vld [vmem:[#allocation7 + $0x40] sm:$0xff]
    %v975 = vld [vmem:[#allocation7 + $0x48] sm:$0xff]
    %v976 = vld [vmem:[#allocation7 + $0x50] sm:$0xff]
    %v977 = vld [vmem:[#allocation7 + $0x58] sm:$0xff]
    %v978 = vld [vmem:[#allocation7 + $0x60] sm:$0xff]
    %v979 = vld [vmem:[#allocation7 + $0x68] sm:$0xff]
    %v980 = vld [vmem:[#allocation7 + $0x70] sm:$0xff]
    %v981 = vld [vmem:[#allocation7 + $0x78] sm:$0xff]
    %v982 = vld [vmem:[#allocation7 + $0x80] sm:$0xff]
    %v983 = vld [vmem:[#allocation7 + $0x88] sm:$0xff]
    %v984 = vld [vmem:[#allocation7 + $0x90] sm:$0xff]
    %v985 = vld [vmem:[#allocation7 + $0x98] sm:$0xff]
    %v986 = vld [vmem:[#allocation7 + $0xa0] sm:$0xff]
    %v987 = vld [vmem:[#allocation7 + $0xa8] sm:$0xff]
    %v988 = vld [vmem:[#allocation7 + $0xb0] sm:$0xff]
    %v989 = vld [vmem:[#allocation7 + $0xb8] sm:$0xff]
    %v990 = vld [vmem:[#allocation7 + $0xc0] sm:$0xff]
    %v991 = vld [vmem:[#allocation7 + $0xc8] sm:$0xff]
    %v992 = vld [vmem:[#allocation7 + $0xd0] sm:$0xff]
    %v993 = vld [vmem:[#allocation7 + $0xd8] sm:$0xff]
    %v994 = vld [vmem:[#allocation7 + $0xe0] sm:$0xff]
    %v995 = vld [vmem:[#allocation7 + $0xe8] sm:$0xff]
    %v996 = vld [vmem:[#allocation7 + $0xf0] sm:$0xff]
    %v997 = vld [vmem:[#allocation7 + $0xf8] sm:$0xff]
    %v998 = vld [vmem:[%s4] sm:$0x3]
    %v1000 = vlaneseq
    %v1001 = vshrl.u32 %v1000, 7
    %v1002 = vsub.s32 0, %v1001
    %v1003 = vrot.slane %v998, %v1002
    %v1004 = vlaneseq
    %v1005 = vshrl.u32 %v1004, 7
    %v1006 = vsub.s32 1, %v1005
    %v1007 = vrot.slane %v998, %v1006
    %v1042 = vunpack.c.l.b16 %v966
    %v1043 = vunpack.c.h.b16 %v966
    %v1044 = vunpack.c.l.b16 %v967
    %v1045 = vunpack.c.h.b16 %v967
    %v1046 = vunpack.c.l.b16 %v968
    %v1047 = vunpack.c.h.b16 %v968
    %v1048 = vunpack.c.l.b16 %v969
    %v1049 = vunpack.c.h.b16 %v969
    %v1050 = vunpack.c.l.b16 %v970
    %v1051 = vunpack.c.h.b16 %v970
    %v1052 = vunpack.c.l.b16 %v971
    %v1053 = vunpack.c.h.b16 %v971
    %v1054 = vunpack.c.l.b16 %v972
    %v1055 = vunpack.c.h.b16 %v972
    %v1056 = vunpack.c.l.b16 %v973
    %v1057 = vunpack.c.h.b16 %v973
    %v1058 = vunpack.c.l.b16 %v974
    %v1059 = vunpack.c.h.b16 %v974
    %v1060 = vunpack.c.l.b16 %v975
    %v1061 = vunpack.c.h.b16 %v975
    %v1062 = vunpack.c.l.b16 %v976
    %v1063 = vunpack.c.h.b16 %v976
    %v1064 = vunpack.c.l.b16 %v977
    %v1065 = vunpack.c.h.b16 %v977
    %v1066 = vunpack.c.l.b16 %v978
    %v1067 = vunpack.c.h.b16 %v978
    %v1068 = vunpack.c.l.b16 %v979
    %v1069 = vunpack.c.h.b16 %v979
    %v1070 = vunpack.c.l.b16 %v980
    %v1071 = vunpack.c.h.b16 %v980
    %v1072 = vunpack.c.l.b16 %v981
    %v1073 = vunpack.c.h.b16 %v981
    %v1074 = vunpack.c.l.b16 %v982
    %v1075 = vunpack.c.h.b16 %v982
    %v1076 = vunpack.c.l.b16 %v983
    %v1077 = vunpack.c.h.b16 %v983
    %v1078 = vunpack.c.l.b16 %v984
    %v1079 = vunpack.c.h.b16 %v984
    %v1080 = vunpack.c.l.b16 %v985
    %v1081 = vunpack.c.h.b16 %v985
    %v1082 = vunpack.c.l.b16 %v986
    %v1083 = vunpack.c.h.b16 %v986
    %v1084 = vunpack.c.l.b16 %v987
    %v1085 = vunpack.c.h.b16 %v987
    %v1086 = vunpack.c.l.b16 %v988
    %v1087 = vunpack.c.h.b16 %v988
    %v1088 = vunpack.c.l.b16 %v989
    %v1089 = vunpack.c.h.b16 %v989
    %v1090 = vunpack.c.l.b16 %v990
    %v1091 = vunpack.c.h.b16 %v990
    %v1092 = vunpack.c.l.b16 %v991
    %v1093 = vunpack.c.h.b16 %v991
    %v1094 = vunpack.c.l.b16 %v992
    %v1095 = vunpack.c.h.b16 %v992
    %v1096 = vunpack.c.l.b16 %v993
    %v1097 = vunpack.c.h.b16 %v993
    %v1098 = vunpack.c.l.b16 %v994
    %v1099 = vunpack.c.h.b16 %v994
    %v1100 = vunpack.c.l.b16 %v995
    %v1101 = vunpack.c.h.b16 %v995
    %v1102 = vunpack.c.l.b16 %v996
    %v1103 = vunpack.c.h.b16 %v996
    %v1104 = vunpack.c.l.b16 %v997
    %v1105 = vunpack.c.h.b16 %v997
    %v1106 = vpack.c.b16 %v1044, %v1042
    %v1107 = vpack.c.b16 %v1045, %v1043
    %v1108 = vpack.c.b16 %v1048, %v1046
    %v1109 = vpack.c.b16 %v1049, %v1047
    %v1110 = vpack.c.b16 %v1052, %v1050
    %v1111 = vpack.c.b16 %v1053, %v1051
    %v1112 = vpack.c.b16 %v1056, %v1054
    %v1113 = vpack.c.b16 %v1057, %v1055
    %v1114 = vpack.c.b16 %v1060, %v1058
    %v1115 = vpack.c.b16 %v1061, %v1059
    %v1116 = vpack.c.b16 %v1064, %v1062
    %v1117 = vpack.c.b16 %v1065, %v1063
    %v1118 = vpack.c.b16 %v1068, %v1066
    %v1119 = vpack.c.b16 %v1069, %v1067
    %v1120 = vpack.c.b16 %v1072, %v1070
    %v1121 = vpack.c.b16 %v1073, %v1071
    %v1122 = vpack.c.b16 %v1076, %v1074
    %v1123 = vpack.c.b16 %v1077, %v1075
    %v1124 = vpack.c.b16 %v1080, %v1078
    %v1125 = vpack.c.b16 %v1081, %v1079
    %v1126 = vpack.c.b16 %v1084, %v1082
    %v1127 = vpack.c.b16 %v1085, %v1083
    %v1128 = vpack.c.b16 %v1088, %v1086
    %v1129 = vpack.c.b16 %v1089, %v1087
    %v1130 = vpack.c.b16 %v1092, %v1090
    %v1131 = vpack.c.b16 %v1093, %v1091
    %v1132 = vpack.c.b16 %v1096, %v1094
    %v1133 = vpack.c.b16 %v1097, %v1095
    %v1134 = vpack.c.b16 %v1100, %v1098
    %v1135 = vpack.c.b16 %v1101, %v1099
    %v1136 = vpack.c.b16 %v1104, %v1102
    %v1137 = vpack.c.b16 %v1105, %v1103
    %1170 = vmatprep.subr.bf16.mxu0 %v1107
    %1171 = vmatpush1.bf16.msra.mxu0 %v1106
    %1172 = vmatprep.subr.bf16.mxu0 %v1109
    %1173 = vmatpush1.bf16.msra.mxu0 %v1108
    %1174 = vmatprep.subr.bf16.mxu0 %v1111
    %1175 = vmatpush1.bf16.msra.mxu0 %v1110
    %1176 = vmatprep.subr.bf16.mxu0 %v1113
    %1177 = vmatpush1.bf16.msra.mxu0 %v1112
    %1178 = vmatprep.subr.bf16.mxu0 %v1115
    %1179 = vmatpush1.bf16.msra.mxu0 %v1114
    %1180 = vmatprep.subr.bf16.mxu0 %v1117
    %1181 = vmatpush1.bf16.msra.mxu0 %v1116
    %1182 = vmatprep.subr.bf16.mxu0 %v1119
    %1183 = vmatpush1.bf16.msra.mxu0 %v1118
    %1184 = vmatprep.subr.bf16.mxu0 %v1121
    %1185 = vmatpush1.bf16.msra.mxu0 %v1120
    %1186 = vmatprep.subr.bf16.mxu0 %v1123
    %1187 = vmatpush1.bf16.msra.mxu0 %v1122
    %1188 = vmatprep.subr.bf16.mxu0 %v1125
    %1189 = vmatpush1.bf16.msra.mxu0 %v1124
    %1190 = vmatprep.subr.bf16.mxu0 %v1127
    %1191 = vmatpush1.bf16.msra.mxu0 %v1126
    %1192 = vmatprep.subr.bf16.mxu0 %v1129
    %1193 = vmatpush1.bf16.msra.mxu0 %v1128
    %1194 = vmatprep.subr.bf16.mxu0 %v1131
    %1195 = vmatpush1.bf16.msra.mxu0 %v1130
    %1196 = vmatprep.subr.bf16.mxu0 %v1133
    %1197 = vmatpush1.bf16.msra.mxu0 %v1132
    %1198 = vmatprep.subr.bf16.mxu0 %v1135
    %1199 = vmatpush1.bf16.msra.mxu0 %v1134
    %1200 = vmatprep.subr.bf16.mxu0 %v1137
    %1201 = vmatpush1.bf16.msra.mxu0 %v1136
    %1202 = vmatprep.mubr.bf16.mxu0 %v965
    %1203 = vmatmul.mubr.bf16.gmra.mrb[0].mxu0 %v964
    %v1204 = vpop.f32.mrb[0].mxu0
    %v1205 = vadd.f32 %v1003, %v1204
    %v1206 = vpop.f32.mrb[0].mxu0
    %v1207 = vadd.f32 %v1007, %v1206
    %v1208 = vpop.f32.mrb[0].mxu0
    %v1209 = vpop.f32.mrb[0].mxu0
    %1210 = vdwg.mxu0
    %vm1211 = vcmp.gt.f32.partialorder %v1205, 0.0
    %vm1212 = vcmp.gt.f32.partialorder %v1207, 0.0
    %v1213 = vmul.f32 %v1205, 0.01
    %v1214 = vmul.f32 %v1207, 0.01
    %v1215 = vsel %vm1211, %v1205, %v1213
    %v1216 = vsel %vm1212, %v1207, %v1214
    %v1217 = vpack.c.bf16 %v1215, %v1215
    %v1218 = vpack.c.bf16 %v1216, %v1216
    %v1219 = vld [vmem:[#allocation8] sm:$0xf]
    %v1220 = vld [vmem:[#allocation8 + $0x4] sm:$0xf]
    %v1221 = vld [vmem:[#allocation8 + $0x8] sm:$0xf]
    %v1222 = vld [vmem:[#allocation8 + $0xc] sm:$0xf]
    %v1223 = vld [vmem:[#allocation8 + $0x10] sm:$0xf]
    %v1224 = vld [vmem:[#allocation8 + $0x14] sm:$0xf]
    %v1225 = vld [vmem:[#allocation8 + $0x18] sm:$0xf]
    %v1226 = vld [vmem:[#allocation8 + $0x1c] sm:$0xf]
    %v1227 = vld [vmem:[#allocation8 + $0x20] sm:$0xf]
    %v1228 = vld [vmem:[#allocation8 + $0x24] sm:$0xf]
    %v1229 = vld [vmem:[#allocation8 + $0x28] sm:$0xf]
    %v1230 = vld [vmem:[#allocation8 + $0x2c] sm:$0xf]
    %v1231 = vld [vmem:[#allocation8 + $0x30] sm:$0xf]
    %v1232 = vld [vmem:[#allocation8 + $0x34] sm:$0xf]
    %v1233 = vld [vmem:[#allocation8 + $0x38] sm:$0xf]
    %v1234 = vld [vmem:[#allocation8 + $0x3c] sm:$0xf]
    %v1235 = vld [vmem:[#allocation8 + $0x40] sm:$0xf]
    %v1236 = vld [vmem:[#allocation8 + $0x44] sm:$0xf]
    %v1237 = vld [vmem:[#allocation8 + $0x48] sm:$0xf]
    %v1238 = vld [vmem:[#allocation8 + $0x4c] sm:$0xf]
    %v1239 = vld [vmem:[#allocation8 + $0x50] sm:$0xf]
    %v1240 = vld [vmem:[#allocation8 + $0x54] sm:$0xf]
    %v1241 = vld [vmem:[#allocation8 + $0x58] sm:$0xf]
    %v1242 = vld [vmem:[#allocation8 + $0x5c] sm:$0xf]
    %v1243 = vld [vmem:[#allocation8 + $0x60] sm:$0xf]
    %v1244 = vld [vmem:[#allocation8 + $0x64] sm:$0xf]
    %v1245 = vld [vmem:[#allocation8 + $0x68] sm:$0xf]
    %v1246 = vld [vmem:[#allocation8 + $0x6c] sm:$0xf]
    %v1247 = vld [vmem:[#allocation8 + $0x70] sm:$0xf]
    %v1248 = vld [vmem:[#allocation8 + $0x74] sm:$0xf]
    %v1249 = vld [vmem:[#allocation8 + $0x78] sm:$0xf]
    %v1250 = vld [vmem:[#allocation8 + $0x7c] sm:$0xf]
    %v1251 = vld [vmem:[%s6] sm:$0x1]
    %v1253 = vlaneseq
    %v1254 = vshrl.u32 %v1253, 7
    %v1255 = vsub.s32 0, %v1254
    %v1256 = vrot.slane %v1251, %v1255
    %v1290 = vunpack.c.l.b16 %v1219
    %v1291 = vunpack.c.l.b16 %v1220
    %v1292 = vunpack.c.l.b16 %v1221
    %v1293 = vunpack.c.l.b16 %v1222
    %v1294 = vunpack.c.l.b16 %v1223
    %v1295 = vunpack.c.l.b16 %v1224
    %v1296 = vunpack.c.l.b16 %v1225
    %v1297 = vunpack.c.l.b16 %v1226
    %v1298 = vunpack.c.l.b16 %v1227
    %v1299 = vunpack.c.l.b16 %v1228
    %v1300 = vunpack.c.l.b16 %v1229
    %v1301 = vunpack.c.l.b16 %v1230
    %v1302 = vunpack.c.l.b16 %v1231
    %v1303 = vunpack.c.l.b16 %v1232
    %v1304 = vunpack.c.l.b16 %v1233
    %v1305 = vunpack.c.l.b16 %v1234
    %v1306 = vunpack.c.l.b16 %v1235
    %v1307 = vunpack.c.l.b16 %v1236
    %v1308 = vunpack.c.l.b16 %v1237
    %v1309 = vunpack.c.l.b16 %v1238
    %v1310 = vunpack.c.l.b16 %v1239
    %v1311 = vunpack.c.l.b16 %v1240
    %v1312 = vunpack.c.l.b16 %v1241
    %v1313 = vunpack.c.l.b16 %v1242
    %v1314 = vunpack.c.l.b16 %v1243
    %v1315 = vunpack.c.l.b16 %v1244
    %v1316 = vunpack.c.l.b16 %v1245
    %v1317 = vunpack.c.l.b16 %v1246
    %v1318 = vunpack.c.l.b16 %v1247
    %v1319 = vunpack.c.l.b16 %v1248
    %v1320 = vunpack.c.l.b16 %v1249
    %v1321 = vunpack.c.l.b16 %v1250
    %v1322 = vpack.c.b16 %v1291, %v1290
    %v1323 = vpack.c.b16 %v1293, %v1292
    %v1324 = vpack.c.b16 %v1295, %v1294
    %v1325 = vpack.c.b16 %v1297, %v1296
    %v1326 = vpack.c.b16 %v1299, %v1298
    %v1327 = vpack.c.b16 %v1301, %v1300
    %v1328 = vpack.c.b16 %v1303, %v1302
    %v1329 = vpack.c.b16 %v1305, %v1304
    %v1330 = vpack.c.b16 %v1307, %v1306
    %v1331 = vpack.c.b16 %v1309, %v1308
    %v1332 = vpack.c.b16 %v1311, %v1310
    %v1333 = vpack.c.b16 %v1313, %v1312
    %v1334 = vpack.c.b16 %v1315, %v1314
    %v1335 = vpack.c.b16 %v1317, %v1316
    %v1336 = vpack.c.b16 %v1319, %v1318
    %v1337 = vpack.c.b16 %v1321, %v1320
    %1354 = vmatprep.subr.bf16.mxu0 0
    %1355 = vmatpush1.bf16.msra.mxu0 %v1322
    %1356 = vmatprep.subr.bf16.mxu0 0
    %1357 = vmatpush1.bf16.msra.mxu0 %v1323
    %1358 = vmatprep.subr.bf16.mxu0 0
    %1359 = vmatpush1.bf16.msra.mxu0 %v1324
    %1360 = vmatprep.subr.bf16.mxu0 0
    %1361 = vmatpush1.bf16.msra.mxu0 %v1325
    %1362 = vmatprep.subr.bf16.mxu0 0
    %1363 = vmatpush1.bf16.msra.mxu0 %v1326
    %1364 = vmatprep.subr.bf16.mxu0 0
    %1365 = vmatpush1.bf16.msra.mxu0 %v1327
    %1366 = vmatprep.subr.bf16.mxu0 0
    %1367 = vmatpush1.bf16.msra.mxu0 %v1328
    %1368 = vmatprep.subr.bf16.mxu0 0
    %1369 = vmatpush1.bf16.msra.mxu0 %v1329
    %1370 = vmatprep.subr.bf16.mxu0 0
    %1371 = vmatpush1.bf16.msra.mxu0 %v1330
    %1372 = vmatprep.subr.bf16.mxu0 0
    %1373 = vmatpush1.bf16.msra.mxu0 %v1331
    %1374 = vmatprep.subr.bf16.mxu0 0
    %1375 = vmatpush1.bf16.msra.mxu0 %v1332
    %1376 = vmatprep.subr.bf16.mxu0 0
    %1377 = vmatpush1.bf16.msra.mxu0 %v1333
    %1378 = vmatprep.subr.bf16.mxu0 0
    %1379 = vmatpush1.bf16.msra.mxu0 %v1334
    %1380 = vmatprep.subr.bf16.mxu0 0
    %1381 = vmatpush1.bf16.msra.mxu0 %v1335
    %1382 = vmatprep.subr.bf16.mxu0 0
    %1383 = vmatpush1.bf16.msra.mxu0 %v1336
    %1384 = vmatprep.subr.bf16.mxu0 0
    %1385 = vmatpush1.bf16.msra.mxu0 %v1337
    %1386 = vmatprep.mubr.bf16.mxu0 %v1218
    %1387 = vmatmul.mubr.bf16.gmra.mrb[0].mxu0 %v1217
    %v1388 = vpop.f32.mrb[0].mxu0
    %v1389 = vadd.f32 %v1256, %v1388
    %v1390 = vpop.f32.mrb[0].mxu0
    %v1391 = vpop.f32.mrb[0].mxu0
    %v1392 = vpop.f32.mrb[0].mxu0
    %1393 = vdwg.mxu0
    %vm1394 = vcmp.gt.f32.partialorder %v1389, 0.0
    %v1395 = vmul.f32 %v1389, 0.01
    %v1396 = vsel %vm1394, %v1389, %v1395
    %1397 = vst [vmem:[#allocation10] sm:$0xff] %v1396
    // Predicated region
    $region46: #{tpu_custom_call.1} parent=1 // pred_check
      _
    $region47: #{tpu_custom_call.1} parent=1 // pred_check_branch
      %1399 = sbr.rel (0) target = $region49
    $region48: #{tpu_custom_call.1} parent=1 // pred_region
      %s1401 = ssub.s32 128, 128
      %1402 = vsyncadd [#allocation4], %s1401
      %s1404 = sshll.u32 [#allocation10], 4
      %s1405 = int_to_ptr.vmem [resolvable:$true] %s1404
      %1407 = dma.vmem_to_hbm [thread:$0]  %s1405, 128, %s7, [#allocation4]
    $region49: #{tpu_custom_call.1} parent=1 // pred_fallthru
      _
    // Predicated region
    $region50: #{tpu_custom_call.1} parent=1 // pred_check
      _
    $region51: #{tpu_custom_call.1} parent=1 // pred_check_branch
      %1409 = sbr.rel (0) target = $region53
    $region52: #{tpu_custom_call.1} parent=1 // pred_region
      %1410 = dma.done [#allocation4], 128
    $region53: #{tpu_custom_call.1} parent=1 // pred_fallthru
      _
    %1411 = vsyncpa [#allocation3], 1
    %1412 = vsyncpa [#allocation6], 1
    %1413 = vsyncpa [#allocation9], 1
    %1414 = vsyncpa [#allocation4], 1

</llo_original>
